<compile_context>
chip_gen: v6e
topology: v6e:2x2x1
jax: 0.10.0
libtpu: 0.0.40
codegen_flags: <defaults>
</compile_context>

<pallas_src>
import math

import jax
import jax.numpy as jnp
from jax.experimental import pallas as pl
from jax.experimental.pallas import tpu as pltpu

_LANE = 128
_SUBLANE_BY_ITEMSIZE = {4: 8, 2: 16, 1: 32}   # f32 / bf16 / int8-fp8
_MAX_LANE_WIDTH = 8192                        # cap for lane-dense flattening


def _bias_add_kernel(x_ref, b_ref, o_ref):
    # x_ref: (tile_r, W) block; b_ref: (1, W) bias row, resident across the
    # grid (constant index_map).  Single VPU add; the (1, W) row broadcasts
    # over sublanes — negligible while HBM-bound.
    o_ref[...] = x_ref[...] + b_ref[...]


def _target_tile_bytes():
    """Per-buffer tile-byte budget; bigger on v7x to amortize per-step overhead."""
    try:
        kind = jax.devices()[0].device_kind.lower()
    except Exception:  # pragma: no cover - defensive
        kind = ""
    if "v7" in kind:
        # ~3.2 TB/s HBM: each DMA is ~2.3x shorter than v6e, so grow tiles to
        # keep the ~0.35us per-grid-step overhead at a few percent.
        return 4 * 1024 * 1024
    return 2 * 1024 * 1024


def _choose_tile_rows(n_rows, width, itemsize, target_bytes):
    """Row-tile size: ~target_bytes per buffer, sublane-aligned, divisor-friendly."""
    sub = _SUBLANE_BY_ITEMSIZE.get(itemsize, 8)
    want = (target_bytes // max(1, width * itemsize)) // sub * sub
    want = max(sub, want)
    if want >= n_rows:
        # A single tile would cover everything.  If a clean even split exists,
        # use it so the "parallel" row grid can shard across v7x's two
        # TensorCores; otherwise keep one full-extent block (always legal).
        if n_rows % (2 * sub) == 0:
            return n_rows // 2
        return n_rows
    # Prefer a sublane-multiple divisor of n_rows <= want: every block is then
    # full-sized, so there is no partial writeback over the aliased output.
    if n_rows % sub == 0:
        cand = want
        while cand >= sub and n_rows % cand != 0:
            cand -= sub
        if cand >= max(sub, want // 4):
            return cand
    # Fall back to a partial last block (Pallas clips the writeback to bounds).
    return want


def _bias_forward_impl(x, bias):
    """y = x + bias, bias broadcast over all leading axes of x."""
    orig_shape = x.shape
    F = orig_shape[-1]
    assert bias.shape == (F,)
    dtype = x.dtype
    itemsize = jnp.dtype(dtype).itemsize
    total = math.prod(orig_shape)

    b = bias.astype(dtype)
    crop = None  # how to undo wrapper-side padding, if any

    if F % _LANE == 0:
        # Natural layout is already lane-dense.
        rows, width = total // F, F
        x2d = x.reshape(rows, width)
        b_row = b.reshape(1, width)
    else:
        lcm = (F * _LANE) // math.gcd(F, _LANE)
        if lcm <= _MAX_LANE_WIDTH:
            # Lane-dense flatten: width is a multiple of both F and 128, so
            # the bias pattern repeats exactly within each row.
            width = lcm
            while width * 2 <= _MAX_LANE_WIDTH and total % (width * 2) == 0:
                width *= 2
            rows = -(-total // width)
            pad = rows * width - total
            flat = x.reshape(total)
            if pad:
                flat = jnp.pad(flat, (0, pad))
            x2d = flat.reshape(rows, width)
            b_row = jnp.tile(b, width // F).reshape(1, width)
            if pad:
                crop = ("flat", total)
        else:
            # lcm too large: pad the feature dim up to the next 128 multiple
            # instead of falling back to masked (vst.msk) partial stores.
            width = -(-F // _LANE) * _LANE
            rows = total // F
            x2d = jnp.pad(x.reshape(rows, F), ((0, 0), (0, width - F)))
            b_row = jnp.pad(b, (0, width - F)).reshape(1, width)
            crop = ("feat", F)

    tile_r = _choose_tile_rows(rows, width, itemsize, _target_tile_bytes())
    grid = (-(-rows // tile_r),)

    tile_bytes = tile_r * width * itemsize
    # 2x double-buffered input + 2x output tiles + bias row + headroom.
    vmem_limit = int(min(48 * 1024 * 1024,
                         max(16 * 1024 * 1024,
                             4 * tile_bytes + 2 * width * itemsize + (1 << 20))))

    cost = pl.CostEstimate(
        flops=rows * width,
        transcendentals=0,
        bytes_accessed=2 * rows * width * itemsize + width * itemsize,
    )

    y2d = pl.pallas_call(
        _bias_add_kernel,
        out_shape=jax.ShapeDtypeStruct((rows, width), dtype),
        grid=grid,
        in_specs=[
            pl.BlockSpec((tile_r, width), lambda i: (i, 0)),
            pl.BlockSpec((1, width), lambda i: (0, 0)),   # bias: fetched once
        ],
        out_specs=pl.BlockSpec((tile_r, width), lambda i: (i, 0)),
        input_output_aliases={0: 0},          # reuse x's buffer (needs donation)
        compiler_params=pltpu.CompilerParams(
            dimension_semantics=("parallel",),  # shard row grid across TCs (v7x)
            vmem_limit_bytes=vmem_limit,
        ),
        cost_estimate=cost,
    )(x2d, b_row)

    if crop is None:
        return y2d.reshape(orig_shape)
    kind, n = crop
    if kind == "flat":
        return y2d.reshape(-1)[:n].reshape(orig_shape)
    return y2d[:, :n].reshape(orig_shape)


# Non-donating variant: x remains valid after the call (XLA may insert a copy
# before the aliased pallas_call).
bias_forward = jax.jit(_bias_forward_impl)

# Donating variant: the aliasing actually takes effect — no defensive HBM copy
# of the activation.  Caller must not reuse x afterwards.
bias_forward_inplace = jax.jit(_bias_forward_impl, donate_argnums=0)


if __name__ == "__main__":
    # Module config: Bias(in_features, out_features)
    in_features = 32
    out_features = 32
    batch = 16

    key = jax.random.PRNGKey(0)
    kx, kb, k2, k3 = jax.random.split(key, 4)

    # Deterministic parameter init matching reset_parameters():
    # bias ~ U(-1/sqrt(in_features), +1/sqrt(in_features))
    stdv = 1.0 / math.sqrt(in_features)
    bias = jax.random.uniform(
        kb, (out_features,), dtype=jnp.float32, minval=-stdv, maxval=stdv
    )
    x = jax.random.normal(kx, (batch, out_features), dtype=jnp.float32)

    # Intended semantics: y = x + b (broadcast).  Compute the reference first
    # so the donating path below can consume a fresh copy of x.
    y_ref = x + bias[None, :]

    # 1) Non-donating path (x stays valid).
    y = jax.block_until_ready(bias_forward(x, bias))
    assert jnp.allclose(y, y_ref, atol=1e-6, rtol=1e-6)

    # 2) Donating / in-place path: input_output_aliases is honored end-to-end.
    x_donate = x + 0.0   # fresh buffer to donate
    y_ip = jax.block_until_ready(bias_forward_inplace(x_donate, bias))
    assert jnp.allclose(y_ip, y_ref, atol=1e-6, rtol=1e-6)

    # 3) Awkward feature dims exercise the padding paths (no masked stores).
    #    a) F=48 -> lane-dense flatten with flat padding (720 % 384 != 0).
    xb = jax.random.normal(k2, (3, 5, 48), dtype=jnp.float32)
    bb = jax.random.uniform(kb, (48,), dtype=jnp.float32, minval=-stdv, maxval=stdv)
    yb = jax.block_until_ready(bias_forward(xb, bb))
    assert jnp.allclose(yb, xb + bb, atol=1e-6, rtol=1e-6)
    #    b) F=129 -> lcm(129,128) too wide, feature-dim padding to 256.
    xc = jax.random.normal(k3, (8, 129), dtype=jnp.float32)
    bc = jax.random.uniform(kb, (129,), dtype=jnp.float32, minval=-stdv, maxval=stdv)
    yc = jax.block_until_ready(bias_forward(xc, bc))
    assert jnp.allclose(yc, xc + bc[None, :], atol=1e-6, rtol=1e-6)

    # As-written PyTorch forward (out-of-place add, result discarded) returns
    # the input unchanged; that degenerate behaviour is just `x` itself.
    print("KERNEL_OK")
</pallas_src>

<mosaic_0001>
module attributes {stable_mosaic.version = 11 : i64} {
  func.func @_bias_add_kernel(%arg0: i32, %arg1: memref<1x512xf32, #tpu.memory_space<vmem>>, %arg2: memref<1x512xf32, #tpu.memory_space<vmem>>, %arg3: memref<1x512xf32, #tpu.memory_space<vmem>>) attributes {dimension_semantics = [#tpu.dimension_semantics<parallel>], iteration_bounds = array<i64: 1>, scalar_prefetch = 0 : i64, scratch_operands = 0 : i64, tpu.core_type = #tpu.core_type<tc>, window_params = [{transform_indices = @transform_0, window_bounds = array<i64: 1, 512>}, {pipeline_mode = #tpu.pipeline_mode<synchronous>, transform_indices = @transform_1, window_bounds = array<i64: 1, 512>}, {transform_indices = @transform_2, window_bounds = array<i64: 1, 512>}]} {
    %c0 = arith.constant 0 : index
    %c0_0 = arith.constant 0 : index
    %0 = vector.load %arg1[%c0, %c0_0] : memref<1x512xf32, #tpu.memory_space<vmem>>, vector<1x512xf32>
    %c0_1 = arith.constant 0 : index
    %c0_2 = arith.constant 0 : index
    %1 = vector.load %arg2[%c0_1, %c0_2] : memref<1x512xf32, #tpu.memory_space<vmem>>, vector<1x512xf32>
    %2 = arith.addf %0, %1 : vector<1x512xf32>
    %c0_3 = arith.constant 0 : index
    %c0_4 = arith.constant 0 : index
    %3 = vector.load %arg3[%c0_3, %c0_4] : memref<1x512xf32, #tpu.memory_space<vmem>>, vector<1x512xf32>
    tpu.vector_store %arg3[%c0_3, %c0_4], %2 {strides = array<i32>} : memref<1x512xf32, #tpu.memory_space<vmem>>, vector<1x512xf32>,
    return
  }
  func.func @transform_0(%arg0: i32) -> (i32, i32) {
    %c0_i32 = arith.constant 0 : i32
    %c0_i32_0 = arith.constant 0 : i32
    return %arg0, %c0_i32 : i32, i32
  }
  func.func @transform_1(%arg0: i32) -> (i32, i32) {
    %c0_i32 = arith.constant 0 : i32
    %c0_i32_0 = arith.constant 0 : i32
    %c0_i32_1 = arith.constant 0 : i32
    return %c0_i32, %c0_i32_0 : i32, i32
  }
  func.func @transform_2(%arg0: i32) -> (i32, i32) {
    %c0_i32 = arith.constant 0 : i32
    %c0_i32_0 = arith.constant 0 : i32
    return %arg0, %c0_i32 : i32, i32
  }
}

</mosaic_0001>

<llo_original>
// kernel: tile.8
$region0: #{tile.8}
  #allocation0 [shape = 's32[1]{0}', space=sflag, size = 0x4, scoped, tag = 'scoped memory for tile.8']
  %s0 = inlined_call_operand.vmem [shape: f32[32], index: 0, kind: input, shape index: {}]
  %s1 = inlined_call_operand.vmem [shape: f32[16,32], index: 1, kind: output, shape index: {}]
  // Predicated region
  $region2: #{tile.8} parent=0 // pred_check
    _
  $region3: #{tile.8} parent=0 // pred_check_branch
    %3 = sbr.rel (0) target = $region5
  $region4: #{tile.8} parent=0 // pred_region
    _
  $region5: #{tile.8} parent=0 // pred_fallthru
    _
  %v4 = vld [vmem:[%s0] ss:$0 sm:$0xff]
  %5 = vst [vmem:[%s1] sm:$0xff] %v4
  %s6 = scalar_lea.vmem %s1, 8
  %7 = vst [vmem:[%s6] sm:$0xff] %v4

// kernel: tile.9
$region0: #{tile.9}
  %s0 = inlined_call_operand.vmem [shape: f32[16,32], index: 0, kind: input, shape index: {}]
  %s1 = inlined_call_operand.vmem [shape: f32[1,512], index: 1, kind: output, shape index: {}]
  $region1: #{tile.9} parent=0
    #allocation0 [shape = 'u8[16384]{0}', space=vmem, size = 0x4000, scoped, tag = 'scoped mem for output reshape']
    %v2 = vld [vmem:[%s0] ss:$4 sm:$0xf]
    %vm3 = vcmask 261120
    %4 = vst.msk [vmem:[#allocation0] ss:$8 sm:$0xf] %vm3, %v2
    %s5 = scalar_lea.vmem %s0, 3
    %v6 = vld [vmem:[%s5] ss:$4 sm:$0xf]
    %7 = vrot.lane.b32.xlu0 %v6, 96
    %v8 = vpop.permute.xlu0 %7
    %vm9 = vcmask 1048320
    %10 = vst.msk [vmem:[#allocation0] ss:$8 sm:$0xf] %vm9, %v8
    %s11 = scalar_lea.vmem %s0, 2
    %v12 = vld [vmem:[%s11] ss:$4 sm:$0xf]
    %13 = vrot.lane.b32.xlu0 %v12, 64
    %v14 = vpop.permute.xlu0 %13
    %vm15 = vcmask 785920
    %16 = vst.msk [vmem:[#allocation0] ss:$8 sm:$0xf] %vm15, %v14
    %s17 = scalar_lea.vmem %s0, 1
    %v18 = vld [vmem:[%s17] ss:$4 sm:$0xf]
    %19 = vrot.lane.b32.xlu0 %v18, 32
    %v20 = vpop.permute.xlu0 %19
    %vm21 = vcmask 523520
    %22 = vst.msk [vmem:[#allocation0] ss:$8 sm:$0xf] %vm21, %v20
    %s24 = sshll.u32 1, 1
    %s25 = ssub.s32 %s24, 1
    %v27 = vld [vmem:[#allocation0] sm:%s25]
    %s28 = sshll.u32 1, 1
    %s29 = ssub.s32 %s28, 1
    %30 = vst [vmem:[%s1] sm:%s29] %v27
    %s31 = scalar_lea.vmem [#allocation0], 8
    %v32 = vld [vmem:[%s31] sm:%s25]
    %s33 = sshll.u32 1, 1
    %s34 = ssub.s32 %s33, 1
    %s35 = scalar_lea.vmem %s1, 1
    %36 = vst [vmem:[%s35] sm:%s34] %v32
    %s37 = scalar_lea.vmem [#allocation0], 16
    %v38 = vld [vmem:[%s37] sm:%s25]
    %s39 = sshll.u32 1, 1
    %s40 = ssub.s32 %s39, 1
    %s41 = smul.addr 1, 2
    %s42 = scalar_lea.vmem %s1, %s41
    %43 = vst [vmem:[%s42] sm:%s40] %v38
    %s44 = scalar_lea.vmem [#allocation0], 24
    %v45 = vld [vmem:[%s44] sm:%s25]
    %s46 = sshll.u32 1, 1
    %s47 = ssub.s32 %s46, 1
    %s48 = smul.addr 1, 3
    %s49 = scalar_lea.vmem %s1, %s48
    %50 = vst [vmem:[%s49] sm:%s47] %v45

// kernel: _bias_forward_impl.1
$region0: #{_bias_forward_impl.1}
  #allocation0 [shape = 'u32[]', space=smem, size = 0x4, offset = 0x4, fixed_abs, tag = 'smem constant byte address 0x4 - core index']
  #allocation1 [shape = 'u32[144,128]{1,0:T(1,128)}', space=vmem, size = 0x12000, scoped, tag = 'internal scratch']
  %s0 = inlined_call_operand.vmem [shape: f32[1,512], index: 0, kind: input, shape index: {}, may-alias: {0,2}]
  %s1 = inlined_call_operand.vmem [shape: f32[1,512], index: 1, kind: input, shape index: {}]
  %s2 = inlined_call_operand.vmem [shape: f32[1,512], index: 2, kind: output, shape index: {}, may-alias: {0,2}]
  %s3 = sld [smem:[#allocation0]]
  $region18: #{_bias_forward_impl.1} parent=0
    _
  %s5 = ssub.s32 1, %s3
  %s6 = scalar_select 0, %s5, %s3
  // Predicated region
  $region2: #{_bias_forward_impl.1} parent=0 // pred_check
    _
  $region3: #{_bias_forward_impl.1} parent=0 // pred_check_branch
    %8 = sbr.rel (0) target = $region5
  $region4: #{_bias_forward_impl.1} parent=0 // pred_region
    _
  $region5: #{_bias_forward_impl.1} parent=0 // pred_fallthru
    _
  // Predicated region
  $region6: #{_bias_forward_impl.1} parent=0 // pred_check
    _
  $region7: #{_bias_forward_impl.1} parent=0 // pred_check_branch
    %10 = sbr.rel (0) target = $region9
  $region8: #{_bias_forward_impl.1} parent=0 // pred_region
    _
  $region9: #{_bias_forward_impl.1} parent=0 // pred_fallthru
    _
  %v11 = vld [vmem:[%s0] sm:$0xf]
  %v12 = vld [vmem:[%s1] sm:$0xf]
  %v13 = vadd.f32 %v11, %v12
  %v14 = vlaneseq
  %vm15 = vcmp.ge.s32.totalorder %v14, 0
  %vm16 = vcmp.lt.s32.totalorder %v14, 512
  %vm17 = vmand %vm15, %vm16
  %18 = vst.msk [vmem:[%s2] sm:$0xf] %vm17, %v13
  // Predicated region
  $region10: #{_bias_forward_impl.1} parent=0 // pred_check
    _
  $region11: #{_bias_forward_impl.1} parent=0 // pred_check_branch
    %20 = sbr.rel (0) target = $region13
  $region12: #{_bias_forward_impl.1} parent=0 // pred_region
    _
  $region13: #{_bias_forward_impl.1} parent=0 // pred_fallthru
    _
  // Predicated region
  $region14: #{_bias_forward_impl.1} parent=0 // pred_check
    _
  $region15: #{_bias_forward_impl.1} parent=0 // pred_check_branch
    %22 = sbr.rel (0) target = $region17
  $region16: #{_bias_forward_impl.1} parent=0 // pred_region
    _
  $region17: #{_bias_forward_impl.1} parent=0 // pred_fallthru
    _

</llo_original>
